<compile_context>
chip_gen: v7x
topology: tpu7x:2x2x1
jax: 0.10.0
libtpu: 0.0.40
codegen_flags: <defaults>
</compile_context>

<pallas_src>
import functools
import numpy as np

import jax
import jax.numpy as jnp
from jax import lax
from jax.experimental import pallas as pl
from jax.experimental.pallas import tpu as pltpu


# ---------------------------------------------------------------------------
# Kernels
# ---------------------------------------------------------------------------

def _linear_ln_relu_kernel(x_ref, w_ref, b_ref, g_ref, beta_ref, o_ref, *,
                           scale_input, eps):
    """Fused (optional input scale) -> Linear -> LayerNorm -> ReLU on a row tile."""
    x = x_ref[...].astype(jnp.float32)
    if scale_input:
        # (x - 0.5) / sqrt(0.25) == (x - 0.5) * 2
        x = (x - 0.5) * 2.0
    h = jnp.dot(x, w_ref[...], preferred_element_type=jnp.float32) + b_ref[...]
    mu = jnp.mean(h, axis=-1, keepdims=True)
    var = jnp.mean(jnp.square(h - mu), axis=-1, keepdims=True)
    hn = (h - mu) * lax.rsqrt(var + eps)
    hn = hn * g_ref[...] + beta_ref[...]
    o_ref[...] = jnp.maximum(hn, 0.0).astype(o_ref.dtype)


def _linear_kernel(x_ref, w_ref, b_ref, o_ref, *, scale_input):
    """(optional input scale) -> Linear on a row tile."""
    x = x_ref[...].astype(jnp.float32)
    if scale_input:
        x = (x - 0.5) * 2.0
    out = jnp.dot(x, w_ref[...], preferred_element_type=jnp.float32) + b_ref[...]
    o_ref[...] = out.astype(o_ref.dtype)


# ---------------------------------------------------------------------------
# Wrappers
# ---------------------------------------------------------------------------

def _round_up(n, m):
    return ((n + m - 1) // m) * m


def _pad_rows(x, tile):
    r = x.shape[0]
    rp = pl.cdiv(r, tile) * tile
    if rp != r:
        x = jnp.pad(x, ((0, rp - r), (0, 0)))
    return x, r


def _row_tiled_call(kernel, x, weight_args, out_dim, row_tile):
    """Run `kernel` over row tiles of x (R, Din); weights are grid-resident."""
    R, Din = x.shape
    rt = min(row_tile, _round_up(R, 8))
    xp, r0 = _pad_rows(x, rt)
    Rp = xp.shape[0]

    in_specs = [pl.BlockSpec((rt, Din), lambda i: (i, 0))]
    for w in weight_args:
        d0, d1 = w.shape
        in_specs.append(pl.BlockSpec((d0, d1), lambda i: (0, 0)))

    out = pl.pallas_call(
        kernel,
        out_shape=jax.ShapeDtypeStruct((Rp, out_dim), jnp.float32),
        grid=(Rp // rt,),
        in_specs=in_specs,
        out_specs=pl.BlockSpec((rt, out_dim), lambda i: (i, 0)),
        compiler_params=pltpu.CompilerParams(
            dimension_semantics=("parallel",),
        ),
    )(xp, *weight_args)
    return out[:r0]


def linear_ln_relu(x, w, b, g, beta, *, scale_input, eps=1e-5, row_tile=2048):
    dout = w.shape[1]
    kernel = functools.partial(_linear_ln_relu_kernel,
                               scale_input=scale_input, eps=eps)
    args = (w, b.reshape(1, dout), g.reshape(1, dout), beta.reshape(1, dout))
    return _row_tiled_call(kernel, x, args, dout, row_tile)


def linear(x, w, b, *, scale_input, row_tile=2048):
    dout = w.shape[1]
    kernel = functools.partial(_linear_kernel, scale_input=scale_input)
    args = (w, b.reshape(1, dout))
    return _row_tiled_call(kernel, x, args, dout, row_tile)


def ff_mlp_forward(x, params, *, row_tile=2048):
    """FF_MLP.forward: scale -> [Linear+LN+ReLU]* -> Linear, over the last dim."""
    lead = x.shape[:-1]
    din = x.shape[-1]
    h = x.reshape(int(np.prod(lead)), din)
    scale = True                      # (x - 0.5) / sqrt(0.25) fused into 1st kernel
    for (w, b, g, beta) in params["layers"]:
        h = linear_ln_relu(h, w, b, g, beta, scale_input=scale, row_tile=row_tile)
        scale = False
    w, b = params["out"]
    out = linear(h, w, b, scale_input=scale, row_tile=row_tile)
    return out.reshape(*lead, out.shape[-1])


def convff_mlp_clevr_forward(datax, params, *, row_tile=2048):
    """ConvFF_MLP_CLEVR.forward."""
    h = ff_mlp_forward(datax, params["HiddenConvFF"], row_tile=row_tile)
    h = jnp.squeeze(h)
    out = ff_mlp_forward(h, params["ObjConvFF"], row_tile=row_tile)
    return jnp.squeeze(out)
    # TODO(synk): self.dropout / sample_mode / sample_size are defined in the
    # PyTorch module but never used in forward(), so they are not implemented.


# ---------------------------------------------------------------------------
# Pure-JAX reference (for correctness check)
# ---------------------------------------------------------------------------

def _ff_mlp_ref(x, params):
    h = (x - 0.5) / np.sqrt(0.25)
    for (w, b, g, beta) in params["layers"]:
        h = h @ w + b
        mu = jnp.mean(h, axis=-1, keepdims=True)
        var = jnp.mean(jnp.square(h - mu), axis=-1, keepdims=True)
        h = (h - mu) / jnp.sqrt(var + 1e-5) * g + beta
        h = jnp.maximum(h, 0.0)
    w, b = params["out"]
    return h @ w + b


def _convff_ref(datax, params):
    h = jnp.squeeze(_ff_mlp_ref(datax, params["HiddenConvFF"]))
    return jnp.squeeze(_ff_mlp_ref(h, params["ObjConvFF"]))


# ---------------------------------------------------------------------------
# Parameter construction (weights stored (in, out), i.e. already transposed
# relative to torch.nn.Linear.weight)
# ---------------------------------------------------------------------------

def _init_ff_mlp(key, input_size, mlp_layer_para, output_size):
    dims = [input_size] + list(mlp_layer_para)
    layers = []
    for i in range(len(dims) - 1):
        key, kw, kb, kg, kbe = jax.random.split(key, 5)
        din, dout = dims[i], dims[i + 1]
        w = jax.random.normal(kw, (din, dout), jnp.float32) / np.sqrt(din)
        b = 0.1 * jax.random.normal(kb, (dout,), jnp.float32)
        g = 1.0 + 0.1 * jax.random.normal(kg, (dout,), jnp.float32)
        beta = 0.1 * jax.random.normal(kbe, (dout,), jnp.float32)
        layers.append((w, b, g, beta))
    key, kw, kb = jax.random.split(key, 3)
    w = jax.random.normal(kw, (dims[-1], output_size), jnp.float32) / np.sqrt(dims[-1])
    b = 0.1 * jax.random.normal(kb, (output_size,), jnp.float32)
    return {"layers": layers, "out": (w, b)}, key


if __name__ == "__main__":
    # Small shapes consistent with forward: datax [b, 4, objN, hd]
    b, choices, objN, hd = 2, 4, 16, 32
    hidden = 32

    key = jax.random.PRNGKey(0)
    key, kx = jax.random.split(key)
    datax = jax.random.uniform(kx, (b, choices, objN, hd), dtype=jnp.float32)

    # HiddenConvFF: hd -> [hidden] -> 1 ;  ObjConvFF: objN -> [hidden] -> 1
    hidden_params, key = _init_ff_mlp(key, hd, [hidden], 1)
    obj_params, key = _init_ff_mlp(key, objN, [hidden], 1)
    params = {"HiddenConvFF": hidden_params, "ObjConvFF": obj_params}

    out = convff_mlp_clevr_forward(datax, params)
    out = jax.block_until_ready(out)

    ref = jax.block_until_ready(_convff_ref(datax, params))

    assert out.shape == (b, choices), f"unexpected output shape {out.shape}"
    assert bool(jnp.all(jnp.isfinite(out)))
    assert bool(jnp.max(jnp.abs(out - ref)) < 1e-4), "mismatch vs pure-JAX reference"

    print("KERNEL_OK")
</pallas_src>

<mosaic_0001>
module attributes {stable_mosaic.version = 11 : i64} {
  func.func @_linear_ln_relu_kernel(%arg0: i32, %arg1: memref<128x32xf32, #tpu.memory_space<vmem>>, %arg2: memref<32x32xf32, #tpu.memory_space<vmem>>, %arg3: memref<1x32xf32, #tpu.memory_space<vmem>>, %arg4: memref<1x32xf32, #tpu.memory_space<vmem>>, %arg5: memref<1x32xf32, #tpu.memory_space<vmem>>, %arg6: memref<128x32xf32, #tpu.memory_space<vmem>>) attributes {dimension_semantics = [#tpu.dimension_semantics<parallel>], iteration_bounds = array<i64: 1>, scalar_prefetch = 0 : i64, scratch_operands = 0 : i64, tpu.core_type = #tpu.core_type<tc>, window_params = [{transform_indices = @transform_0, window_bounds = array<i64: 128, 32>}, {pipeline_mode = #tpu.pipeline_mode<synchronous>, transform_indices = @transform_1, window_bounds = array<i64: 32, 32>}, {pipeline_mode = #tpu.pipeline_mode<synchronous>, transform_indices = @transform_2, window_bounds = array<i64: 1, 32>}, {pipeline_mode = #tpu.pipeline_mode<synchronous>, transform_indices = @transform_3, window_bounds = array<i64: 1, 32>}, {pipeline_mode = #tpu.pipeline_mode<synchronous>, transform_indices = @transform_4, window_bounds = array<i64: 1, 32>}, {transform_indices = @transform_5, window_bounds = array<i64: 128, 32>}]} {
    %c0 = arith.constant 0 : index
    %c0_0 = arith.constant 0 : index
    %0 = vector.load %arg1[%c0, %c0_0] : memref<128x32xf32, #tpu.memory_space<vmem>>, vector<128x32xf32>
    %cst = arith.constant 5.000000e-01 : f32
    %1 = vector.broadcast %cst : f32 to vector<128x32xf32>
    %2 = arith.subf %0, %1 : vector<128x32xf32>
    %cst_1 = arith.constant 2.000000e+00 : f32
    %3 = vector.broadcast %cst_1 : f32 to vector<128x32xf32>
    %4 = arith.mulf %2, %3 : vector<128x32xf32>
    %c0_2 = arith.constant 0 : index
    %c0_3 = arith.constant 0 : index
    %5 = vector.load %arg2[%c0_2, %c0_3] : memref<32x32xf32, #tpu.memory_space<vmem>>, vector<32x32xf32>
    %cst_4 = arith.constant dense<0.000000e+00> : vector<128x32xf32>
    %6 = tpu.matmul %4, %5, %cst_4 {dimension_numbers = #tpu.dot_dimension_numbers<[1], [0], [0], [1], [0, 0, 1, 1], [], []>} : vector<128x32xf32>, vector<32x32xf32>, vector<128x32xf32> -> vector<128x32xf32>
    %c0_5 = arith.constant 0 : index
    %c0_6 = arith.constant 0 : index
    %7 = vector.load %arg3[%c0_5, %c0_6] : memref<1x32xf32, #tpu.memory_space<vmem>>, vector<1x32xf32>
    %8 = vector.broadcast %7 : vector<1x32xf32> to vector<128x32xf32>
    %9 = arith.addf %6, %8 : vector<128x32xf32>
    %cst_7 = arith.constant dense<0.000000e+00> : vector<128xf32>
    %10 = vector.multi_reduction <add>, %9, %cst_7 [1] : vector<128x32xf32> to vector<128xf32>
    %11 = vector.shape_cast %10 : vector<128xf32> to vector<128x1xf32>
    %cst_8 = arith.constant 3.200000e+01 : f32
    %12 = vector.broadcast %cst_8 : f32 to vector<128x1xf32>
    %13 = arith.divf %11, %12 : vector<128x1xf32>
    %14 = vector.broadcast %13 : vector<128x1xf32> to vector<128x32xf32>
    %15 = arith.subf %9, %14 : vector<128x32xf32>
    %16 = arith.mulf %15, %15 : vector<128x32xf32>
    %cst_9 = arith.constant dense<0.000000e+00> : vector<128xf32>
    %17 = vector.multi_reduction <add>, %16, %cst_9 [1] : vector<128x32xf32> to vector<128xf32>
    %18 = vector.shape_cast %17 : vector<128xf32> to vector<128x1xf32>
    %cst_10 = arith.constant 3.200000e+01 : f32
    %19 = vector.broadcast %cst_10 : f32 to vector<128x1xf32>
    %20 = arith.divf %18, %19 : vector<128x1xf32>
    %21 = vector.broadcast %13 : vector<128x1xf32> to vector<128x32xf32>
    %22 = arith.subf %9, %21 : vector<128x32xf32>
    %cst_11 = arith.constant 9.99999974E-6 : f32
    %23 = vector.broadcast %cst_11 : f32 to vector<128x1xf32>
    %24 = arith.addf %20, %23 : vector<128x1xf32>
    %25 = math.rsqrt %24 : vector<128x1xf32>
    %26 = vector.broadcast %25 : vector<128x1xf32> to vector<128x32xf32>
    %27 = arith.mulf %22, %26 : vector<128x32xf32>
    %c0_12 = arith.constant 0 : index
    %c0_13 = arith.constant 0 : index
    %28 = vector.load %arg4[%c0_12, %c0_13] : memref<1x32xf32, #tpu.memory_space<vmem>>, vector<1x32xf32>
    %29 = vector.broadcast %28 : vector<1x32xf32> to vector<128x32xf32>
    %30 = arith.mulf %27, %29 : vector<128x32xf32>
    %c0_14 = arith.constant 0 : index
    %c0_15 = arith.constant 0 : index
    %31 = vector.load %arg5[%c0_14, %c0_15] : memref<1x32xf32, #tpu.memory_space<vmem>>, vector<1x32xf32>
    %32 = vector.broadcast %31 : vector<1x32xf32> to vector<128x32xf32>
    %33 = arith.addf %30, %32 : vector<128x32xf32>
    %cst_16 = arith.constant 0.000000e+00 : f32
    %34 = vector.broadcast %cst_16 : f32 to vector<128x32xf32>
    %35 = arith.maximumf %33, %34 : vector<128x32xf32>
    %c0_17 = arith.constant 0 : index
    %c0_18 = arith.constant 0 : index
    %36 = vector.load %arg6[%c0_17, %c0_18] : memref<128x32xf32, #tpu.memory_space<vmem>>, vector<128x32xf32>
    tpu.vector_store %arg6[%c0_17, %c0_18], %35 {strides = array<i32>} : memref<128x32xf32, #tpu.memory_space<vmem>>, vector<128x32xf32>,
    return
  }
  func.func @transform_0(%arg0: i32) -> (i32, i32) {
    %c0_i32 = arith.constant 0 : i32
    %c0_i32_0 = arith.constant 0 : i32
    return %arg0, %c0_i32 : i32, i32
  }
  func.func @transform_1(%arg0: i32) -> (i32, i32) {
    %c0_i32 = arith.constant 0 : i32
    %c0_i32_0 = arith.constant 0 : i32
    %c0_i32_1 = arith.constant 0 : i32
    return %c0_i32, %c0_i32_0 : i32, i32
  }
  func.func @transform_2(%arg0: i32) -> (i32, i32) {
    %c0_i32 = arith.constant 0 : i32
    %c0_i32_0 = arith.constant 0 : i32
    %c0_i32_1 = arith.constant 0 : i32
    return %c0_i32, %c0_i32_0 : i32, i32
  }
  func.func @transform_3(%arg0: i32) -> (i32, i32) {
    %c0_i32 = arith.constant 0 : i32
    %c0_i32_0 = arith.constant 0 : i32
    %c0_i32_1 = arith.constant 0 : i32
    return %c0_i32, %c0_i32_0 : i32, i32
  }
  func.func @transform_4(%arg0: i32) -> (i32, i32) {
    %c0_i32 = arith.constant 0 : i32
    %c0_i32_0 = arith.constant 0 : i32
    %c0_i32_1 = arith.constant 0 : i32
    return %c0_i32, %c0_i32_0 : i32, i32
  }
  func.func @transform_5(%arg0: i32) -> (i32, i32) {
    %c0_i32 = arith.constant 0 : i32
    %c0_i32_0 = arith.constant 0 : i32
    return %arg0, %c0_i32 : i32, i32
  }
}

</mosaic_0001>

<llo_original>
// kernel: tpu_custom_call.1
$region0: #{tpu_custom_call.1}
  #allocation0 [shape = 'u32[]', space=smem, size = 0x4, offset = 0x4, fixed_abs, tag = 'smem constant byte address 0x4 - core index']
  #allocation1 [shape = 'u32[144,128]{1,0:T(1,128)}', space=vmem, size = 0x12000, scoped, tag = 'internal scratch']
  %s0 = inlined_call_operand.vmem [shape: f32[128,32], index: 0, kind: input, shape index: {}]
  %s1 = inlined_call_operand.vmem [shape: f32[32,32], index: 1, kind: input, shape index: {}]
  %s2 = inlined_call_operand.vmem [shape: f32[1,32], index: 2, kind: input, shape index: {}]
  %s3 = inlined_call_operand.vmem [shape: f32[1,32], index: 3, kind: input, shape index: {}]
  %s4 = inlined_call_operand.vmem [shape: f32[1,32], index: 4, kind: input, shape index: {}]
  %s5 = inlined_call_operand.vmem [shape: f32[128,32], index: 5, kind: output, shape index: {}]
  %s6 = sld [smem:[#allocation0]]
  $region30: #{tpu_custom_call.1} parent=0
    _
  %s8 = ssub.s32 1, %s6
  %s9 = scalar_select 0, %s8, %s6
  // Predicated region
  $region2: #{tpu_custom_call.1} parent=0 // pred_check
    _
  $region3: #{tpu_custom_call.1} parent=0 // pred_check_branch
    %11 = sbr.rel (0) target = $region5
  $region4: #{tpu_custom_call.1} parent=0 // pred_region
    _
  $region5: #{tpu_custom_call.1} parent=0 // pred_fallthru
    _
  // Predicated region
  $region6: #{tpu_custom_call.1} parent=0 // pred_check
    _
  $region7: #{tpu_custom_call.1} parent=0 // pred_check_branch
    %13 = sbr.rel (0) target = $region9
  $region8: #{tpu_custom_call.1} parent=0 // pred_region
    _
  $region9: #{tpu_custom_call.1} parent=0 // pred_fallthru
    _
  // Predicated region
  $region10: #{tpu_custom_call.1} parent=0 // pred_check
    _
  $region11: #{tpu_custom_call.1} parent=0 // pred_check_branch
    %15 = sbr.rel (0) target = $region13
  $region12: #{tpu_custom_call.1} parent=0 // pred_region
    _
  $region13: #{tpu_custom_call.1} parent=0 // pred_fallthru
    _
  // Predicated region
  $region14: #{tpu_custom_call.1} parent=0 // pred_check
    _
  $region15: #{tpu_custom_call.1} parent=0 // pred_check_branch
    %17 = sbr.rel (0) target = $region17
  $region16: #{tpu_custom_call.1} parent=0 // pred_region
    _
  $region17: #{tpu_custom_call.1} parent=0 // pred_fallthru
    _
  // Predicated region
  $region18: #{tpu_custom_call.1} parent=0 // pred_check
    _
  $region19: #{tpu_custom_call.1} parent=0 // pred_check_branch
    %19 = sbr.rel (0) target = $region21
  $region20: #{tpu_custom_call.1} parent=0 // pred_region
    _
  $region21: #{tpu_custom_call.1} parent=0 // pred_fallthru
    _
  %v20 = vld [vmem:[%s0] sm:$0xff]
  %v21 = vld [vmem:[%s0 + $0x8] sm:$0xff]
  %v22 = vld [vmem:[%s0 + $0x10] sm:$0xff]
  %v23 = vld [vmem:[%s0 + $0x18] sm:$0xff]
  %v24 = vld [vmem:[%s0 + $0x20] sm:$0xff]
  %v25 = vld [vmem:[%s0 + $0x28] sm:$0xff]
  %v26 = vld [vmem:[%s0 + $0x30] sm:$0xff]
  %v27 = vld [vmem:[%s0 + $0x38] sm:$0xff]
  %v28 = vld [vmem:[%s0 + $0x40] sm:$0xff]
  %v29 = vld [vmem:[%s0 + $0x48] sm:$0xff]
  %v30 = vld [vmem:[%s0 + $0x50] sm:$0xff]
  %v31 = vld [vmem:[%s0 + $0x58] sm:$0xff]
  %v32 = vld [vmem:[%s0 + $0x60] sm:$0xff]
  %v33 = vld [vmem:[%s0 + $0x68] sm:$0xff]
  %v34 = vld [vmem:[%s0 + $0x70] sm:$0xff]
  %v35 = vld [vmem:[%s0 + $0x78] sm:$0xff]
  %v36 = vsub.f32 %v20, 0.5
  %v37 = vsub.f32 %v21, 0.5
  %v38 = vsub.f32 %v22, 0.5
  %v39 = vsub.f32 %v23, 0.5
  %v40 = vsub.f32 %v24, 0.5
  %v41 = vsub.f32 %v25, 0.5
  %v42 = vsub.f32 %v26, 0.5
  %v43 = vsub.f32 %v27, 0.5
  %v44 = vsub.f32 %v28, 0.5
  %v45 = vsub.f32 %v29, 0.5
  %v46 = vsub.f32 %v30, 0.5
  %v47 = vsub.f32 %v31, 0.5
  %v48 = vsub.f32 %v32, 0.5
  %v49 = vsub.f32 %v33, 0.5
  %v50 = vsub.f32 %v34, 0.5
  %v51 = vsub.f32 %v35, 0.5
  %v52 = vmul.f32 %v36, 2.0
  %v53 = vmul.f32 %v37, 2.0
  %v54 = vmul.f32 %v38, 2.0
  %v55 = vmul.f32 %v39, 2.0
  %v56 = vmul.f32 %v40, 2.0
  %v57 = vmul.f32 %v41, 2.0
  %v58 = vmul.f32 %v42, 2.0
  %v59 = vmul.f32 %v43, 2.0
  %v60 = vmul.f32 %v44, 2.0
  %v61 = vmul.f32 %v45, 2.0
  %v62 = vmul.f32 %v46, 2.0
  %v63 = vmul.f32 %v47, 2.0
  %v64 = vmul.f32 %v48, 2.0
  %v65 = vmul.f32 %v49, 2.0
  %v66 = vmul.f32 %v50, 2.0
  %v67 = vmul.f32 %v51, 2.0
  %v68 = vld [vmem:[%s1] sm:$0xff]
  %v69 = vld [vmem:[%s1 + $0x8] sm:$0xff]
  %v70 = vld [vmem:[%s1 + $0x10] sm:$0xff]
  %v71 = vld [vmem:[%s1 + $0x18] sm:$0xff]
  %v72 = vld [vmem:[%s2] sm:$0x1]
  %v74 = vlaneseq
  %v75 = vshrl.u32 %v74, 7
  %v76 = vsub.s32 0, %v75
  %v77 = vrot.slane %v72, %v76
  %vm79 = vcmask 261120
  %v81 = vsel %vm79, %v52, 0
  %v84 = vsel %vm79, %v53, 0
  %v87 = vsel %vm79, %v54, 0
  %v90 = vsel %vm79, %v55, 0
  %v93 = vsel %vm79, %v56, 0
  %v96 = vsel %vm79, %v57, 0
  %v99 = vsel %vm79, %v58, 0
  %v102 = vsel %vm79, %v59, 0
  %v105 = vsel %vm79, %v60, 0
  %v108 = vsel %vm79, %v61, 0
  %v111 = vsel %vm79, %v62, 0
  %v114 = vsel %vm79, %v63, 0
  %v117 = vsel %vm79, %v64, 0
  %v120 = vsel %vm79, %v65, 0
  %v123 = vsel %vm79, %v66, 0
  %v126 = vsel %vm79, %v67, 0
  %128 = vmatprep.subr.mxu0 0.0
  %129 = vmatpush1.msra.mxu0 %v68
  %130 = vmatprep.subr.mxu0 0.0
  %131 = vmatpush1.msra.mxu0 %v69
  %132 = vmatprep.subr.mxu0 0.0
  %133 = vmatpush1.msra.mxu0 %v70
  %134 = vmatprep.subr.mxu0 0.0
  %135 = vmatpush1.msra.mxu0 %v71
  %136 = vmatprep.subr.mxu0 0.0
  %137 = vmatpush1.msra.mxu0 0.0
  %138 = vmatprep.subr.mxu0 0.0
  %139 = vmatpush1.msra.mxu0 0.0
  %140 = vmatprep.subr.mxu0 0.0
  %141 = vmatpush1.msra.mxu0 0.0
  %142 = vmatprep.subr.mxu0 0.0
  %143 = vmatpush1.msra.mxu0 0.0
  %144 = vmatprep.subr.mxu0 0.0
  %145 = vmatpush1.msra.mxu0 0.0
  %146 = vmatprep.subr.mxu0 0.0
  %147 = vmatpush1.msra.mxu0 0.0
  %148 = vmatprep.subr.mxu0 0.0
  %149 = vmatpush1.msra.mxu0 0.0
  %150 = vmatprep.subr.mxu0 0.0
  %151 = vmatpush1.msra.mxu0 0.0
  %152 = vmatprep.subr.mxu0 0.0
  %153 = vmatpush1.msra.mxu0 0.0
  %154 = vmatprep.subr.mxu0 0.0
  %155 = vmatpush1.msra.mxu0 0.0
  %156 = vmatprep.subr.mxu0 0.0
  %157 = vmatpush1.msra.mxu0 0.0
  %158 = vmatprep.subr.mxu0 0.0
  %159 = vmatpush1.msra.mxu0 0.0
  %160 = vmatprep.subr.mxu0 0.0
  %161 = vmatpush1.msra.mxu0 0.0
  %162 = vmatprep.subr.mxu0 0.0
  %163 = vmatpush1.msra.mxu0 0.0
  %164 = vmatprep.subr.mxu0 0.0
  %165 = vmatpush1.msra.mxu0 0.0
  %166 = vmatprep.subr.mxu0 0.0
  %167 = vmatpush1.msra.mxu0 0.0
  %168 = vmatprep.subr.mxu0 0.0
  %169 = vmatpush1.msra.mxu0 0.0
  %170 = vmatprep.subr.mxu0 0.0
  %171 = vmatpush1.msra.mxu0 0.0
  %172 = vmatprep.subr.mxu0 0.0
  %173 = vmatpush1.msra.mxu0 0.0
  %174 = vmatprep.subr.mxu0 0.0
  %175 = vmatpush1.msra.mxu0 0.0
  %176 = vmatprep.subr.mxu0 0.0
  %177 = vmatpush1.msra.mxu0 0.0
  %178 = vmatprep.subr.mxu0 0.0
  %179 = vmatpush1.msra.mxu0 0.0
  %180 = vmatprep.subr.mxu0 0.0
  %181 = vmatpush1.msra.mxu0 0.0
  %182 = vmatprep.subr.mxu0 0.0
  %183 = vmatpush1.msra.mxu0 0.0
  %184 = vmatprep.subr.mxu0 0.0
  %185 = vmatpush1.msra.mxu0 0.0
  %186 = vmatprep.subr.mxu0 0.0
  %187 = vmatpush1.msra.mxu0 0.0
  %188 = vmatprep.subr.mxu0 0.0
  %189 = vmatpush1.msra.mxu0 0.0
  %190 = vmatprep.subr.mxu0 0.0
  %191 = vmatpush1.msra.mxu0 0.0
  %192 = vmatprep.mubr.f32.mxu0 0.0
  %193 = vmatmul.mubr.f32.gmra.mrb[0].mxu0 %v81
  %v194 = vpop.f32.mrb[0].mxu0
  %v195 = vadd.f32 %v77, %v194
  %v196 = vpop.f32.mrb[0].mxu0
  %197 = vmatprep.mubr.f32.mxu0 0.0
  %198 = vmatmul.mubr.f32.gmra.mrb[0].mxu0 %v84
  %v199 = vpop.f32.mrb[0].mxu0
  %v200 = vadd.f32 %v77, %v199
  %v201 = vpop.f32.mrb[0].mxu0
  %202 = vmatprep.mubr.f32.mxu0 0.0
  %203 = vmatmul.mubr.f32.gmra.mrb[0].mxu0 %v87
  %v204 = vpop.f32.mrb[0].mxu0
  %v205 = vadd.f32 %v77, %v204
  %v206 = vpop.f32.mrb[0].mxu0
  %207 = vmatprep.mubr.f32.mxu0 0.0
  %208 = vmatmul.mubr.f32.gmra.mrb[0].mxu0 %v90
  %v209 = vpop.f32.mrb[0].mxu0
  %v210 = vadd.f32 %v77, %v209
  %v211 = vpop.f32.mrb[0].mxu0
  %212 = vmatprep.mubr.f32.mxu0 0.0
  %213 = vmatmul.mubr.f32.gmra.mrb[0].mxu0 %v93
  %v214 = vpop.f32.mrb[0].mxu0
  %v215 = vadd.f32 %v77, %v214
  %v216 = vpop.f32.mrb[0].mxu0
  %217 = vmatprep.mubr.f32.mxu0 0.0
  %218 = vmatmul.mubr.f32.gmra.mrb[0].mxu0 %v96
  %v219 = vpop.f32.mrb[0].mxu0
  %v220 = vadd.f32 %v77, %v219
  %v221 = vpop.f32.mrb[0].mxu0
  %222 = vmatprep.mubr.f32.mxu0 0.0
  %223 = vmatmul.mubr.f32.gmra.mrb[0].mxu0 %v99
  %v224 = vpop.f32.mrb[0].mxu0
  %v225 = vadd.f32 %v77, %v224
  %v226 = vpop.f32.mrb[0].mxu0
  %227 = vmatprep.mubr.f32.mxu0 0.0
  %228 = vmatmul.mubr.f32.gmra.mrb[0].mxu0 %v102
  %v229 = vpop.f32.mrb[0].mxu0
  %v230 = vadd.f32 %v77, %v229
  %v231 = vpop.f32.mrb[0].mxu0
  %232 = vmatprep.mubr.f32.mxu0 0.0
  %233 = vmatmul.mubr.f32.gmra.mrb[0].mxu0 %v105
  %v234 = vpop.f32.mrb[0].mxu0
  %v235 = vadd.f32 %v77, %v234
  %v236 = vpop.f32.mrb[0].mxu0
  %237 = vmatprep.mubr.f32.mxu0 0.0
  %238 = vmatmul.mubr.f32.gmra.mrb[0].mxu0 %v108
  %v239 = vpop.f32.mrb[0].mxu0
  %v240 = vadd.f32 %v77, %v239
  %v241 = vpop.f32.mrb[0].mxu0
  %242 = vmatprep.mubr.f32.mxu0 0.0
  %243 = vmatmul.mubr.f32.gmra.mrb[0].mxu0 %v111
  %v244 = vpop.f32.mrb[0].mxu0
  %v245 = vadd.f32 %v77, %v244
  %v246 = vpop.f32.mrb[0].mxu0
  %247 = vmatprep.mubr.f32.mxu0 0.0
  %248 = vmatmul.mubr.f32.gmra.mrb[0].mxu0 %v114
  %v249 = vpop.f32.mrb[0].mxu0
  %v250 = vadd.f32 %v77, %v249
  %v251 = vpop.f32.mrb[0].mxu0
  %252 = vmatprep.mubr.f32.mxu0 0.0
  %253 = vmatmul.mubr.f32.gmra.mrb[0].mxu0 %v117
  %v254 = vpop.f32.mrb[0].mxu0
  %v255 = vadd.f32 %v77, %v254
  %v256 = vpop.f32.mrb[0].mxu0
  %257 = vmatprep.mubr.f32.mxu0 0.0
  %258 = vmatmul.mubr.f32.gmra.mrb[0].mxu0 %v120
  %v259 = vpop.f32.mrb[0].mxu0
  %v260 = vadd.f32 %v77, %v259
  %v261 = vpop.f32.mrb[0].mxu0
  %262 = vmatprep.mubr.f32.mxu0 0.0
  %263 = vmatmul.mubr.f32.gmra.mrb[0].mxu0 %v123
  %v264 = vpop.f32.mrb[0].mxu0
  %v265 = vadd.f32 %v77, %v264
  %v266 = vpop.f32.mrb[0].mxu0
  %267 = vmatprep.mubr.f32.mxu0 0.0
  %268 = vmatmul.mubr.f32.gmra.mrb[0].mxu0 %v126
  %v269 = vpop.f32.mrb[0].mxu0
  %v270 = vadd.f32 %v77, %v269
  %v271 = vpop.f32.mrb[0].mxu0
  %272 = vdwg.mxu0
  %v273 = vsel %vm79, %v195, 0.0
  %274 = vadd.xlane.f32.xlu0 %v273
  %v275 = vpop.xlane.xlu0 %274
  %v276 = vsel %vm79, %v200, 0.0
  %277 = vadd.xlane.f32.xlu0 %v276
  %v278 = vpop.xlane.xlu0 %277
  %v279 = vsel %vm79, %v205, 0.0
  %280 = vadd.xlane.f32.xlu0 %v279
  %v281 = vpop.xlane.xlu0 %280
  %v282 = vsel %vm79, %v210, 0.0
  %283 = vadd.xlane.f32.xlu0 %v282
  %v284 = vpop.xlane.xlu0 %283
  %v285 = vsel %vm79, %v215, 0.0
  %286 = vadd.xlane.f32.xlu0 %v285
  %v287 = vpop.xlane.xlu0 %286
  %v288 = vsel %vm79, %v220, 0.0
  %289 = vadd.xlane.f32.xlu0 %v288
  %v290 = vpop.xlane.xlu0 %289
  %v291 = vsel %vm79, %v225, 0.0
  %292 = vadd.xlane.f32.xlu0 %v291
  %v293 = vpop.xlane.xlu0 %292
  %v294 = vsel %vm79, %v230, 0.0
  %295 = vadd.xlane.f32.xlu0 %v294
  %v296 = vpop.xlane.xlu0 %295
  %v297 = vsel %vm79, %v235, 0.0
  %298 = vadd.xlane.f32.xlu0 %v297
  %v299 = vpop.xlane.xlu0 %298
  %v300 = vsel %vm79, %v240, 0.0
  %301 = vadd.xlane.f32.xlu0 %v300
  %v302 = vpop.xlane.xlu0 %301
  %v303 = vsel %vm79, %v245, 0.0
  %304 = vadd.xlane.f32.xlu0 %v303
  %v305 = vpop.xlane.xlu0 %304
  %v306 = vsel %vm79, %v250, 0.0
  %307 = vadd.xlane.f32.xlu0 %v306
  %v308 = vpop.xlane.xlu0 %307
  %v309 = vsel %vm79, %v255, 0.0
  %310 = vadd.xlane.f32.xlu0 %v309
  %v311 = vpop.xlane.xlu0 %310
  %v312 = vsel %vm79, %v260, 0.0
  %313 = vadd.xlane.f32.xlu0 %v312
  %v314 = vpop.xlane.xlu0 %313
  %v315 = vsel %vm79, %v265, 0.0
  %316 = vadd.xlane.f32.xlu0 %v315
  %v317 = vpop.xlane.xlu0 %316
  %v318 = vsel %vm79, %v270, 0.0
  %319 = vadd.xlane.f32.xlu0 %v318
  %v320 = vpop.xlane.xlu0 %319
  %v321 = vrcp.pop 32.0
  %v322 = vmul.f32 %v275, %v321
  %v323 = vmul.f32 %v278, %v321
  %v324 = vmul.f32 %v281, %v321
  %v325 = vmul.f32 %v284, %v321
  %v326 = vmul.f32 %v287, %v321
  %v327 = vmul.f32 %v290, %v321
  %v328 = vmul.f32 %v293, %v321
  %v329 = vmul.f32 %v296, %v321
  %v330 = vmul.f32 %v299, %v321
  %v331 = vmul.f32 %v302, %v321
  %v332 = vmul.f32 %v305, %v321
  %v333 = vmul.f32 %v308, %v321
  %v334 = vmul.f32 %v311, %v321
  %v335 = vmul.f32 %v314, %v321
  %v336 = vmul.f32 %v317, %v321
  %v337 = vmul.f32 %v320, %v321
  %v338 = vsub.f32 %v195, %v322
  %v339 = vsub.f32 %v200, %v323
  %v340 = vsub.f32 %v205, %v324
  %v341 = vsub.f32 %v210, %v325
  %v342 = vsub.f32 %v215, %v326
  %v343 = vsub.f32 %v220, %v327
  %v344 = vsub.f32 %v225, %v328
  %v345 = vsub.f32 %v230, %v329
  %v346 = vsub.f32 %v235, %v330
  %v347 = vsub.f32 %v240, %v331
  %v348 = vsub.f32 %v245, %v332
  %v349 = vsub.f32 %v250, %v333
  %v350 = vsub.f32 %v255, %v334
  %v351 = vsub.f32 %v260, %v335
  %v352 = vsub.f32 %v265, %v336
  %v353 = vsub.f32 %v270, %v337
  %v354 = vmul.f32 %v338, %v338
  %v355 = vmul.f32 %v339, %v339
  %v356 = vmul.f32 %v340, %v340
  %v357 = vmul.f32 %v341, %v341
  %v358 = vmul.f32 %v342, %v342
  %v359 = vmul.f32 %v343, %v343
  %v360 = vmul.f32 %v344, %v344
  %v361 = vmul.f32 %v345, %v345
  %v362 = vmul.f32 %v346, %v346
  %v363 = vmul.f32 %v347, %v347
  %v364 = vmul.f32 %v348, %v348
  %v365 = vmul.f32 %v349, %v349
  %v366 = vmul.f32 %v350, %v350
  %v367 = vmul.f32 %v351, %v351
  %v368 = vmul.f32 %v352, %v352
  %v369 = vmul.f32 %v353, %v353
  %v370 = vsel %vm79, %v354, 0.0
  %371 = vadd.xlane.f32.xlu0 %v370
  %v372 = vpop.xlane.xlu0 %371
  %v373 = vsel %vm79, %v355, 0.0
  %374 = vadd.xlane.f32.xlu0 %v373
  %v375 = vpop.xlane.xlu0 %374
  %v376 = vsel %vm79, %v356, 0.0
  %377 = vadd.xlane.f32.xlu0 %v376
  %v378 = vpop.xlane.xlu0 %377
  %v379 = vsel %vm79, %v357, 0.0
  %380 = vadd.xlane.f32.xlu0 %v379
  %v381 = vpop.xlane.xlu0 %380
  %v382 = vsel %vm79, %v358, 0.0
  %383 = vadd.xlane.f32.xlu0 %v382
  %v384 = vpop.xlane.xlu0 %383
  %v385 = vsel %vm79, %v359, 0.0
  %386 = vadd.xlane.f32.xlu0 %v385
  %v387 = vpop.xlane.xlu0 %386
  %v388 = vsel %vm79, %v360, 0.0
  %389 = vadd.xlane.f32.xlu0 %v388
  %v390 = vpop.xlane.xlu0 %389
  %v391 = vsel %vm79, %v361, 0.0
  %392 = vadd.xlane.f32.xlu0 %v391
  %v393 = vpop.xlane.xlu0 %392
  %v394 = vsel %vm79, %v362, 0.0
  %395 = vadd.xlane.f32.xlu0 %v394
  %v396 = vpop.xlane.xlu0 %395
  %v397 = vsel %vm79, %v363, 0.0
  %398 = vadd.xlane.f32.xlu0 %v397
  %v399 = vpop.xlane.xlu0 %398
  %v400 = vsel %vm79, %v364, 0.0
  %401 = vadd.xlane.f32.xlu0 %v400
  %v402 = vpop.xlane.xlu0 %401
  %v403 = vsel %vm79, %v365, 0.0
  %404 = vadd.xlane.f32.xlu0 %v403
  %v405 = vpop.xlane.xlu0 %404
  %v406 = vsel %vm79, %v366, 0.0
  %407 = vadd.xlane.f32.xlu0 %v406
  %v408 = vpop.xlane.xlu0 %407
  %v409 = vsel %vm79, %v367, 0.0
  %410 = vadd.xlane.f32.xlu0 %v409
  %v411 = vpop.xlane.xlu0 %410
  %v412 = vsel %vm79, %v368, 0.0
  %413 = vadd.xlane.f32.xlu0 %v412
  %v414 = vpop.xlane.xlu0 %413
  %v415 = vsel %vm79, %v369, 0.0
  %416 = vadd.xlane.f32.xlu0 %v415
  %v417 = vpop.xlane.xlu0 %416
  %v418 = vmul.f32 %v372, %v321
  %v419 = vmul.f32 %v375, %v321
  %v420 = vmul.f32 %v378, %v321
  %v421 = vmul.f32 %v381, %v321
  %v422 = vmul.f32 %v384, %v321
  %v423 = vmul.f32 %v387, %v321
  %v424 = vmul.f32 %v390, %v321
  %v425 = vmul.f32 %v393, %v321
  %v426 = vmul.f32 %v396, %v321
  %v427 = vmul.f32 %v399, %v321
  %v428 = vmul.f32 %v402, %v321
  %v429 = vmul.f32 %v405, %v321
  %v430 = vmul.f32 %v408, %v321
  %v431 = vmul.f32 %v411, %v321
  %v432 = vmul.f32 %v414, %v321
  %v433 = vmul.f32 %v417, %v321
  %v434 = vadd.f32 %v418, 1e-05
  %v435 = vadd.f32 %v419, 1e-05
  %v436 = vadd.f32 %v420, 1e-05
  %v437 = vadd.f32 %v421, 1e-05
  %v438 = vadd.f32 %v422, 1e-05
  %v439 = vadd.f32 %v423, 1e-05
  %v440 = vadd.f32 %v424, 1e-05
  %v441 = vadd.f32 %v425, 1e-05
  %v442 = vadd.f32 %v426, 1e-05
  %v443 = vadd.f32 %v427, 1e-05
  %v444 = vadd.f32 %v428, 1e-05
  %v445 = vadd.f32 %v429, 1e-05
  %v446 = vadd.f32 %v430, 1e-05
  %v447 = vadd.f32 %v431, 1e-05
  %v448 = vadd.f32 %v432, 1e-05
  %v449 = vadd.f32 %v433, 1e-05
  %v450 = vrsqrt.pop %v434
  %v451 = vrsqrt.pop %v435
  %v452 = vrsqrt.pop %v436
  %v453 = vrsqrt.pop %v437
  %v454 = vrsqrt.pop %v438
  %v455 = vrsqrt.pop %v439
  %v456 = vrsqrt.pop %v440
  %v457 = vrsqrt.pop %v441
  %v458 = vrsqrt.pop %v442
  %v459 = vrsqrt.pop %v443
  %v460 = vrsqrt.pop %v444
  %v461 = vrsqrt.pop %v445
  %v462 = vrsqrt.pop %v446
  %v463 = vrsqrt.pop %v447
  %v464 = vrsqrt.pop %v448
  %v465 = vrsqrt.pop %v449
  %v466 = vmul.f32 %v338, %v450
  %v467 = vmul.f32 %v339, %v451
  %v468 = vmul.f32 %v340, %v452
  %v469 = vmul.f32 %v341, %v453
  %v470 = vmul.f32 %v342, %v454
  %v471 = vmul.f32 %v343, %v455
  %v472 = vmul.f32 %v344, %v456
  %v473 = vmul.f32 %v345, %v457
  %v474 = vmul.f32 %v346, %v458
  %v475 = vmul.f32 %v347, %v459
  %v476 = vmul.f32 %v348, %v460
  %v477 = vmul.f32 %v349, %v461
  %v478 = vmul.f32 %v350, %v462
  %v479 = vmul.f32 %v351, %v463
  %v480 = vmul.f32 %v352, %v464
  %v481 = vmul.f32 %v353, %v465
  %v482 = vld [vmem:[%s3] sm:$0x1]
  %v484 = vlaneseq
  %v485 = vshrl.u32 %v484, 7
  %v486 = vsub.s32 0, %v485
  %v487 = vrot.slane %v482, %v486
  %v489 = vmul.f32 %v466, %v487
  %v490 = vmul.f32 %v467, %v487
  %v491 = vmul.f32 %v468, %v487
  %v492 = vmul.f32 %v469, %v487
  %v493 = vmul.f32 %v470, %v487
  %v494 = vmul.f32 %v471, %v487
  %v495 = vmul.f32 %v472, %v487
  %v496 = vmul.f32 %v473, %v487
  %v497 = vmul.f32 %v474, %v487
  %v498 = vmul.f32 %v475, %v487
  %v499 = vmul.f32 %v476, %v487
  %v500 = vmul.f32 %v477, %v487
  %v501 = vmul.f32 %v478, %v487
  %v502 = vmul.f32 %v479, %v487
  %v503 = vmul.f32 %v480, %v487
  %v504 = vmul.f32 %v481, %v487
  %v505 = vld [vmem:[%s4] sm:$0x1]
  %v507 = vlaneseq
  %v508 = vshrl.u32 %v507, 7
  %v509 = vsub.s32 0, %v508
  %v510 = vrot.slane %v505, %v509
  %v512 = vadd.f32 %v489, %v510
  %v513 = vadd.f32 %v490, %v510
  %v514 = vadd.f32 %v491, %v510
  %v515 = vadd.f32 %v492, %v510
  %v516 = vadd.f32 %v493, %v510
  %v517 = vadd.f32 %v494, %v510
  %v518 = vadd.f32 %v495, %v510
  %v519 = vadd.f32 %v496, %v510
  %v520 = vadd.f32 %v497, %v510
  %v521 = vadd.f32 %v498, %v510
  %v522 = vadd.f32 %v499, %v510
  %v523 = vadd.f32 %v500, %v510
  %v524 = vadd.f32 %v501, %v510
  %v525 = vadd.f32 %v502, %v510
  %v526 = vadd.f32 %v503, %v510
  %v527 = vadd.f32 %v504, %v510
  %v528 = vmax.f32 %v512, 0.0
  %v529 = vmax.f32 %v513, 0.0
  %v530 = vmax.f32 %v514, 0.0
  %v531 = vmax.f32 %v515, 0.0
  %v532 = vmax.f32 %v516, 0.0
  %v533 = vmax.f32 %v517, 0.0
  %v534 = vmax.f32 %v518, 0.0
  %v535 = vmax.f32 %v519, 0.0
  %v536 = vmax.f32 %v520, 0.0
  %v537 = vmax.f32 %v521, 0.0
  %v538 = vmax.f32 %v522, 0.0
  %v539 = vmax.f32 %v523, 0.0
  %v540 = vmax.f32 %v524, 0.0
  %v541 = vmax.f32 %v525, 0.0
  %v542 = vmax.f32 %v526, 0.0
  %v543 = vmax.f32 %v527, 0.0
  %544 = vst.msk [vmem:[%s5] sm:$0xff] %vm79, %v528
  %545 = vst.msk [vmem:[%s5 + $0x8] sm:$0xff] %vm79, %v529
  %546 = vst.msk [vmem:[%s5 + $0x10] sm:$0xff] %vm79, %v530
  %547 = vst.msk [vmem:[%s5 + $0x18] sm:$0xff] %vm79, %v531
  %548 = vst.msk [vmem:[%s5 + $0x20] sm:$0xff] %vm79, %v532
  %549 = vst.msk [vmem:[%s5 + $0x28] sm:$0xff] %vm79, %v533
  %550 = vst.msk [vmem:[%s5 + $0x30] sm:$0xff] %vm79, %v534
  %551 = vst.msk [vmem:[%s5 + $0x38] sm:$0xff] %vm79, %v535
  %552 = vst.msk [vmem:[%s5 + $0x40] sm:$0xff] %vm79, %v536
  %553 = vst.msk [vmem:[%s5 + $0x48] sm:$0xff] %vm79, %v537
  %554 = vst.msk [vmem:[%s5 + $0x50] sm:$0xff] %vm79, %v538
  %555 = vst.msk [vmem:[%s5 + $0x58] sm:$0xff] %vm79, %v539
  %556 = vst.msk [vmem:[%s5 + $0x60] sm:$0xff] %vm79, %v540
  %557 = vst.msk [vmem:[%s5 + $0x68] sm:$0xff] %vm79, %v541
  %558 = vst.msk [vmem:[%s5 + $0x70] sm:$0xff] %vm79, %v542
  %559 = vst.msk [vmem:[%s5 + $0x78] sm:$0xff] %vm79, %v543
  // Predicated region
  $region22: #{tpu_custom_call.1} parent=0 // pred_check
    _
  $region23: #{tpu_custom_call.1} parent=0 // pred_check_branch
    %561 = sbr.rel (0) target = $region25
  $region24: #{tpu_custom_call.1} parent=0 // pred_region
    _
  $region25: #{tpu_custom_call.1} parent=0 // pred_fallthru
    _
  // Predicated region
  $region26: #{tpu_custom_call.1} parent=0 // pred_check
    _
  $region27: #{tpu_custom_call.1} parent=0 // pred_check_branch
    %563 = sbr.rel (0) target = $region29
  $region28: #{tpu_custom_call.1} parent=0 // pred_region
    _
  $region29: #{tpu_custom_call.1} parent=0 // pred_fallthru
    _

</llo_original>
